<compile_context>
chip_gen: v5e
topology: v5e:2x2
jax: 0.10.0
libtpu: 0.0.40
codegen_flags: <defaults>
</compile_context>

<pallas_src>
import jax
import jax.numpy as jnp
from jax.experimental import pallas as pl
from jax.experimental.pallas import tpu as pltpu


# ----------------------------- kernel bodies ------------------------------ #

def _ffn_kernel_single_k(x_ref, w2_ref, b2_ref, o_ref):
    """Single reduction step: no scratch accumulator, direct store."""
    o_ref[...] = (
        jnp.dot(x_ref[...], w2_ref[...], preferred_element_type=jnp.float32)
        + b2_ref[...]
    ).astype(o_ref.dtype)


def _ffn_kernel_multi_k(x_ref, w2_ref, b2_ref, o_ref, acc_ref):
    """Output-stationary accumulation over the (last, 'arbitrary') K axis."""
    k = pl.program_id(2)

    @pl.when(k == 0)
    def _():
        acc_ref[...] = jnp.zeros_like(acc_ref)

    acc_ref[...] += jnp.dot(
        x_ref[...], w2_ref[...], preferred_element_type=jnp.float32
    )

    @pl.when(k == pl.num_programs(2) - 1)
    def _():
        o_ref[...] = (acc_ref[...] + b2_ref[...]).astype(o_ref.dtype)


# ----------------------------- tile planning ------------------------------ #

def _round_up(x, m):
    return ((x + m - 1) // m) * m


def _sublane_align(dtype):
    """Minimum sublane tile per dtype width: f32 -> 8, bf16 -> 16, int8 -> 32."""
    return {4: 8, 2: 16, 1: 32}.get(jnp.dtype(dtype).itemsize, 8)


def _plan_dim(dim, cap, align):
    """Return (tile, padded_dim).

    tile is a multiple of `align`, at most max(cap rounded to align, align),
    and divides padded_dim exactly.  Never returns a pathological untiled
    dimension: large dims get padded up to a multiple of the cap instead.
    """
    cap = max(align, (cap // align) * align)
    if dim <= cap:
        tile = _round_up(dim, align)
        return tile, tile
    return cap, _round_up(dim, cap)


# ------------------------------- wrapper ----------------------------------- #

def ffn_forward(x, w2, b2, *, tm_cap=1024, tn_cap=512, tk_cap=2048,
                vmem_limit_bytes=48 * 1024 * 1024):
    """x: [B, S, d_model]; w2: [d_ff, d_model] stored [in, out]; b2: [1, d_model].

    Returns linear2(x) = x @ w2 + b2, matching the reference forward (the
    linear1/ReLU result is discarded by the reference, so it is not computed).
    """
    B, S, D = x.shape
    K, N = w2.shape
    assert D == K, "FFN reference requires d_model == d_ff (linear2 applied to x)"

    dtype = x.dtype
    M = B * S
    x2d = x.reshape(M, K)

    align_m = _sublane_align(dtype)
    tm, M_pad = _plan_dim(M, tm_cap, align_m)
    tn, N_pad = _plan_dim(N, tn_cap, 128)
    tk, K_pad = _plan_dim(K, tk_cap, 128)

    # v7x megacore: if both 'parallel' axes collapsed to a single block but the
    # row count is big enough to be worth splitting, give each TensorCore a tile.
    if M_pad // tm == 1 and N_pad // tn == 1 and M_pad >= 2 * 512:
        tm = _round_up(pl.cdiv(M_pad, 2), align_m)
        M_pad = 2 * tm

    # Zero-pad to the tile plan.  Zero K-columns contribute nothing to the dot;
    # padded M rows / N columns are cropped from the output below.
    if (M_pad, K_pad) != (M, K):
        x2d = jnp.pad(x2d, ((0, M_pad - M), (0, K_pad - K)))
    w2p = w2 if (K_pad, N_pad) == (K, N) else jnp.pad(
        w2, ((0, K_pad - K), (0, N_pad - N)))
    b2p = b2 if N_pad == N else jnp.pad(b2, ((0, 0), (0, N_pad - N)))

    grid_m, grid_n, grid_k = M_pad // tm, N_pad // tn, K_pad // tk

    itemsize = jnp.dtype(dtype).itemsize
    cost = pl.CostEstimate(
        flops=2 * M_pad * N_pad * K_pad,
        transcendentals=0,
        # x is re-read once per N tile, w2 once per M tile, plus bias + output.
        bytes_accessed=(M_pad * K_pad * grid_n
                        + K_pad * N_pad * grid_m
                        + N_pad
                        + M_pad * N_pad) * itemsize,
    )

    if grid_k == 1:
        # Whole reduction in one shot: 2-D parallel grid, no accumulator.
        kernel = _ffn_kernel_single_k
        dims = ("parallel", "parallel")
        grid_spec = pltpu.PrefetchScalarGridSpec(
            num_scalar_prefetch=0,
            grid=(grid_m, grid_n),
            in_specs=[
                pl.BlockSpec((tm, tk), lambda i, j: (i, 0)),   # x tile
                pl.BlockSpec((tk, tn), lambda i, j: (0, j)),   # w2 tile
                pl.BlockSpec((1, tn), lambda i, j: (0, j)),    # bias tile
            ],
            out_specs=pl.BlockSpec((tm, tn), lambda i, j: (i, j)),
        )
    else:
        kernel = _ffn_kernel_multi_k
        dims = ("parallel", "parallel", "arbitrary")
        grid_spec = pltpu.PrefetchScalarGridSpec(
            num_scalar_prefetch=0,
            grid=(grid_m, grid_n, grid_k),
            in_specs=[
                pl.BlockSpec((tm, tk), lambda i, j, k: (i, k)),  # x tile
                pl.BlockSpec((tk, tn), lambda i, j, k: (k, j)),  # w2 tile
                pl.BlockSpec((1, tn), lambda i, j, k: (0, j)),   # bias tile
            ],
            out_specs=pl.BlockSpec((tm, tn), lambda i, j, k: (i, j)),
            scratch_shapes=[pltpu.VMEM((tm, tn), jnp.float32)],
        )

    out2d = pl.pallas_call(
        kernel,
        out_shape=jax.ShapeDtypeStruct((M_pad, N_pad), dtype),
        grid_spec=grid_spec,
        compiler_params=pltpu.CompilerParams(
            dimension_semantics=dims,
            vmem_limit_bytes=vmem_limit_bytes,
        ),
        cost_estimate=cost,
    )(x2d, w2p, b2p)

    return out2d[:M, :N].reshape(B, S, N)


def init_params(key, d_model, d_ff, dtype=jnp.float32):
    """Deterministic synthetic init mirroring nn.Linear shapes.

    PyTorch nn.Linear(d_in, d_out) stores weight [d_out, d_in]; we store the
    transpose [d_in, d_out] so the kernel does x @ W + b directly.  w1/b1 are
    still created (module state) but never touch the kernel -- the reference
    forward discards linear1's output.
    """
    k1, k2, k3, k4 = jax.random.split(key, 4)
    s1 = 1.0 / jnp.sqrt(d_model)
    s2 = 1.0 / jnp.sqrt(d_ff)
    w1 = jax.random.uniform(k1, (d_model, d_ff), dtype, -s1, s1)
    b1 = jax.random.uniform(k2, (1, d_ff), dtype, -s1, s1)
    w2 = jax.random.uniform(k3, (d_ff, d_model), dtype, -s2, s2)
    b2 = jax.random.uniform(k4, (1, d_model), dtype, -s2, s2)
    return w1, b1, w2, b2


if __name__ == "__main__":
    # Small, lane-dense shapes (d_model must equal d_ff for the reference module).
    B, S, d_model, d_ff = 2, 8, 128, 128

    key = jax.random.PRNGKey(0)
    kx, kp = jax.random.split(key)
    x = jax.random.normal(kx, (B, S, d_model), jnp.float32)
    w1, b1, w2, b2 = init_params(kp, d_model, d_ff)

    out = ffn_forward(x, w2, b2)
    out = jax.block_until_ready(out)

    # Pure-JAX reference of the (buggy) forward: out = x @ w2 + b2
    ref = (x.reshape(B * S, d_model) @ w2 + b2).reshape(B, S, d_model)
    assert out.shape == (B, S, d_model)
    assert jnp.allclose(out, ref, atol=1e-5, rtol=1e-5)

    print("KERNEL_OK")
</pallas_src>

<mosaic_0001>
module attributes {stable_mosaic.version = 11 : i64} {
  func.func @_ffn_kernel_single_k(%arg0: i32, %arg1: i32, %arg2: memref<16x128xf32, #tpu.memory_space<vmem>>, %arg3: memref<128x128xf32, #tpu.memory_space<vmem>>, %arg4: memref<1x128xf32, #tpu.memory_space<vmem>>, %arg5: memref<16x128xf32, #tpu.memory_space<vmem>>) attributes {dimension_semantics = [#tpu.dimension_semantics<parallel>, #tpu.dimension_semantics<parallel>], iteration_bounds = array<i64: 1, 1>, scalar_prefetch = 0 : i64, scratch_operands = 0 : i64, tpu.core_type = #tpu.core_type<tc>, window_params = [{transform_indices = @transform_0, window_bounds = array<i64: 16, 128>}, {transform_indices = @transform_1, window_bounds = array<i64: 128, 128>}, {transform_indices = @transform_2, window_bounds = array<i64: 1, 128>}, {transform_indices = @transform_3, window_bounds = array<i64: 16, 128>}]} {
    %c0 = arith.constant 0 : index
    %c0_0 = arith.constant 0 : index
    %0 = vector.load %arg2[%c0, %c0_0] : memref<16x128xf32, #tpu.memory_space<vmem>>, vector<16x128xf32>
    %c0_1 = arith.constant 0 : index
    %c0_2 = arith.constant 0 : index
    %1 = vector.load %arg3[%c0_1, %c0_2] : memref<128x128xf32, #tpu.memory_space<vmem>>, vector<128x128xf32>
    %cst = arith.constant dense<0.000000e+00> : vector<16x128xf32>
    %2 = tpu.matmul %0, %1, %cst {dimension_numbers = #tpu.dot_dimension_numbers<[1], [0], [0], [1], [0, 0, 1, 1], [], []>} : vector<16x128xf32>, vector<128x128xf32>, vector<16x128xf32> -> vector<16x128xf32>
    %c0_3 = arith.constant 0 : index
    %c0_4 = arith.constant 0 : index
    %3 = vector.load %arg4[%c0_3, %c0_4] : memref<1x128xf32, #tpu.memory_space<vmem>>, vector<1x128xf32>
    %4 = vector.broadcast %3 : vector<1x128xf32> to vector<16x128xf32>
    %5 = arith.addf %2, %4 : vector<16x128xf32>
    %c0_5 = arith.constant 0 : index
    %c0_6 = arith.constant 0 : index
    %6 = vector.load %arg5[%c0_5, %c0_6] : memref<16x128xf32, #tpu.memory_space<vmem>>, vector<16x128xf32>
    tpu.vector_store %arg5[%c0_5, %c0_6], %5 {strides = array<i32>} : memref<16x128xf32, #tpu.memory_space<vmem>>, vector<16x128xf32>,
    return
  }
  func.func @transform_0(%arg0: i32, %arg1: i32) -> (i32, i32) {
    %c0_i32 = arith.constant 0 : i32
    %c0_i32_0 = arith.constant 0 : i32
    return %arg0, %c0_i32 : i32, i32
  }
  func.func @transform_1(%arg0: i32, %arg1: i32) -> (i32, i32) {
    %c0_i32 = arith.constant 0 : i32
    %c0_i32_0 = arith.constant 0 : i32
    return %c0_i32, %arg1 : i32, i32
  }
  func.func @transform_2(%arg0: i32, %arg1: i32) -> (i32, i32) {
    %c0_i32 = arith.constant 0 : i32
    %c0_i32_0 = arith.constant 0 : i32
    return %c0_i32, %arg1 : i32, i32
  }
  func.func @transform_3(%arg0: i32, %arg1: i32) -> (i32, i32) {
    %c0_i32 = arith.constant 0 : i32
    return %arg0, %arg1 : i32, i32
  }
}

</mosaic_0001>

<llo_original>
// kernel: tpu_custom_call.1
$region0: #{tpu_custom_call.1}
  #allocation0 [shape = 'u32[]', space=smem, size = 0x4, offset = 0x4, fixed_abs, tag = 'smem constant byte address 0x4 - core index']
  #allocation1 [shape = 'u32[72,128]{1,0:T(1,128)}', space=vmem, size = 0x9000, scoped, tag = 'internal scratch']
  %s0 = inlined_call_operand.hbm [shape: f32[16,128], index: 0, kind: input, shape index: {}]
  %s1 = inlined_call_operand.hbm [shape: f32[128,128], index: 1, kind: input, shape index: {}]
  %s2 = inlined_call_operand.vmem [shape: f32[1,128], index: 2, kind: input, shape index: {}]
  %s3 = inlined_call_operand.hbm [shape: f32[16,128], index: 3, kind: output, shape index: {}]
  %s4 = sld [smem:[#allocation0]]
  $region30: #{tpu_custom_call.1} parent=0
    _
  %s6 = ssub.s32 1, %s4
  %s7 = scalar_select 0, %s6, %s4
  $region1: #{tpu_custom_call.1} parent=0
    #allocation2 [shape = 'u8[8192]{0}', space=vmem, size = 0x2000, scoped, tag = 'input window, operand 0, single buffered']
    #allocation3 [shape = 's32[1]{0}', space=sflag, size = 0x4, scoped, tag = 'scoped memory for tpu_custom_call.1']
    #allocation4 [shape = 's32[1]{0}', space=sflag, size = 0x4, scoped, tag = 'scoped memory for tpu_custom_call.1']
    #allocation5 [shape = 'u8[65536]{0}', space=vmem, size = 0x10000, scoped, tag = 'input window, operand 1, single buffered']
    #allocation6 [shape = 's32[1]{0}', space=sflag, size = 0x4, scoped, tag = 'scoped memory for tpu_custom_call.1']
    #allocation7 [shape = 'u8[8192]{0}', space=vmem, size = 0x2000, scoped, tag = 'output window, operand 0, single buffered']
    %8 = vsyncpa [#allocation3], 0
    %9 = vsyncpa [#allocation6], 0
    %10 = vsyncpa [#allocation4], 0
    // Predicated region
    $region2: #{tpu_custom_call.1} parent=1 // pred_check
      _
    $region3: #{tpu_custom_call.1} parent=1 // pred_check_branch
      %12 = sbr.rel (0) target = $region5
    $region4: #{tpu_custom_call.1} parent=1 // pred_region
      %14 = vsyncadd [#allocation3], 0
      %s15 = sshll.u32 %s0, 4
      %s16 = int_to_ptr.hbm [resolvable:$true] %s15
      %s17 = sshll.u32 [#allocation2], 4
      %s18 = int_to_ptr.vmem [resolvable:$true] %s17
      %23 = dma.hbm_to_vmem [thread:$0]  %s16, 256, %s18, [#allocation3], 128, 128, 8
    $region5: #{tpu_custom_call.1} parent=1 // pred_fallthru
      _
    // Predicated region
    $region6: #{tpu_custom_call.1} parent=1 // pred_check
      _
    $region7: #{tpu_custom_call.1} parent=1 // pred_check_branch
      %25 = sbr.rel (0) target = $region9
    $region8: #{tpu_custom_call.1} parent=1 // pred_region
      %27 = vsyncadd [#allocation6], 0
      %s28 = sshll.u32 %s1, 4
      %s29 = int_to_ptr.hbm [resolvable:$true] %s28
      %s30 = sshll.u32 [#allocation5], 4
      %s31 = int_to_ptr.vmem [resolvable:$true] %s30
      %36 = dma.hbm_to_vmem [thread:$0]  %s29, 2048, %s31, [#allocation6], 128, 128, 8
    $region9: #{tpu_custom_call.1} parent=1 // pred_fallthru
      _
    // Predicated region
    $region10: #{tpu_custom_call.1} parent=1 // pred_check
      _
    $region11: #{tpu_custom_call.1} parent=1 // pred_check_branch
      %38 = sbr.rel (0) target = $region13
    $region12: #{tpu_custom_call.1} parent=1 // pred_region
      _
    $region13: #{tpu_custom_call.1} parent=1 // pred_fallthru
      _
    // Predicated region
    $region14: #{tpu_custom_call.1} parent=1 // pred_check
      _
    $region15: #{tpu_custom_call.1} parent=1 // pred_check_branch
      %40 = sbr.rel (0) target = $region17
    $region16: #{tpu_custom_call.1} parent=1 // pred_region
      %42 = dma.done [#allocation3], 256
    $region17: #{tpu_custom_call.1} parent=1 // pred_fallthru
      _
    // Predicated region
    $region18: #{tpu_custom_call.1} parent=1 // pred_check
      _
    $region19: #{tpu_custom_call.1} parent=1 // pred_check_branch
      %44 = sbr.rel (0) target = $region21
    $region20: #{tpu_custom_call.1} parent=1 // pred_region
      %46 = dma.done [#allocation6], 2048
    $region21: #{tpu_custom_call.1} parent=1 // pred_fallthru
      _
    %v47 = vld [vmem:[#allocation2] sm:$0xff]
    %v48 = vld [vmem:[#allocation2 + $0x8] sm:$0xff]
    %v49 = vld [vmem:[#allocation5] sm:$0xff]
    %v50 = vld [vmem:[#allocation5 + $0x8] sm:$0xff]
    %v51 = vld [vmem:[#allocation5 + $0x10] sm:$0xff]
    %v52 = vld [vmem:[#allocation5 + $0x18] sm:$0xff]
    %v53 = vld [vmem:[#allocation5 + $0x20] sm:$0xff]
    %v54 = vld [vmem:[#allocation5 + $0x28] sm:$0xff]
    %v55 = vld [vmem:[#allocation5 + $0x30] sm:$0xff]
    %v56 = vld [vmem:[#allocation5 + $0x38] sm:$0xff]
    %v57 = vld [vmem:[#allocation5 + $0x40] sm:$0xff]
    %v58 = vld [vmem:[#allocation5 + $0x48] sm:$0xff]
    %v59 = vld [vmem:[#allocation5 + $0x50] sm:$0xff]
    %v60 = vld [vmem:[#allocation5 + $0x58] sm:$0xff]
    %v61 = vld [vmem:[#allocation5 + $0x60] sm:$0xff]
    %v62 = vld [vmem:[#allocation5 + $0x68] sm:$0xff]
    %v63 = vld [vmem:[#allocation5 + $0x70] sm:$0xff]
    %v64 = vld [vmem:[#allocation5 + $0x78] sm:$0xff]
    %v65 = vld [vmem:[%s2] sm:$0x1]
    %v67 = vperm.slane %v65, 0
    %69 = vmatpush.msra.mxu0 %v64
    %70 = vmatpush.msra.mxu0 %v63
    %71 = vmatpush.msra.mxu0 %v62
    %72 = vmatpush.msra.mxu0 %v61
    %73 = vmatpush.msra.mxu0 %v60
    %74 = vmatpush.msra.mxu0 %v59
    %75 = vmatpush.msra.mxu0 %v58
    %76 = vmatpush.msra.mxu0 %v57
    %77 = vmatpush.msra.mxu0 %v56
    %78 = vmatpush.msra.mxu0 %v55
    %79 = vmatpush.msra.mxu0 %v54
    %80 = vmatpush.msra.mxu0 %v53
    %81 = vmatpush.msra.mxu0 %v52
    %82 = vmatpush.msra.mxu0 %v51
    %83 = vmatpush.msra.mxu0 %v50
    %84 = vmatpush.msra.mxu0 %v49
    %85 = vmatmul.f32.gmra.mxu0 %v47
    %v86 = vpop.f32.mrf.mxu0
    %v87 = vadd.f32 %v67, %v86
    %88 = vmatmul.f32.gmra.mxu0 %v48
    %v89 = vpop.f32.mrf.mxu0
    %v90 = vadd.f32 %v67, %v89
    %91 = vdwg.mxu0
    %92 = vst [vmem:[#allocation7] sm:$0xff] %v87
    %93 = vst [vmem:[#allocation7 + $0x8] sm:$0xff] %v90
    // Predicated region
    $region22: #{tpu_custom_call.1} parent=1 // pred_check
      _
    $region23: #{tpu_custom_call.1} parent=1 // pred_check_branch
      %95 = sbr.rel (0) target = $region25
    $region24: #{tpu_custom_call.1} parent=1 // pred_region
      %97 = vsyncadd [#allocation4], 0
      %s98 = sshll.u32 [#allocation7], 4
      %s99 = int_to_ptr.vmem [resolvable:$true] %s98
      %s100 = sshll.u32 %s3, 4
      %s101 = int_to_ptr.hbm [resolvable:$true] %s100
      %106 = dma.vmem_to_hbm [thread:$0]  %s99, 256, %s101, [#allocation4], 128, 128, 8
    $region25: #{tpu_custom_call.1} parent=1 // pred_fallthru
      _
    // Predicated region
    $region26: #{tpu_custom_call.1} parent=1 // pred_check
      _
    $region27: #{tpu_custom_call.1} parent=1 // pred_check_branch
      %108 = sbr.rel (0) target = $region29
    $region28: #{tpu_custom_call.1} parent=1 // pred_region
      %110 = dma.done [#allocation4], 256
    $region29: #{tpu_custom_call.1} parent=1 // pred_fallthru
      _
    %111 = vsyncpa [#allocation3], 1
    %112 = vsyncpa [#allocation6], 1
    %113 = vsyncpa [#allocation4], 1

</llo_original>
